<compile_context>
chip_gen: v6e
topology: v6e:2x2x1
jax: 0.10.0
libtpu: 0.0.40
codegen_flags: <defaults>
</compile_context>

<pallas_src>
import functools
import math

import jax
import jax.numpy as jnp
from jax import lax
from jax.experimental import pallas as pl
from jax.experimental.pallas import tpu as pltpu

_EPS = 1e-5


def _conformer_conv_kernel(x_ref, halo_ref, ln_g_ref, ln_b_ref,
                           w1a_ref, w1g_ref, b1a_ref, b1g_ref,
                           dw_ref, db_ref, w2_ref, b2_ref,
                           o_ref, *, kernel_size, halo_pad):
    Bb, TT, F = x_ref.shape
    K = kernel_size
    P = (K - 1) // 2
    Ph = halo_pad                      # halo rows per side (>= P, multiple of 8)
    TT2 = TT + 2 * Ph

    x = x_ref[...].astype(jnp.float32)          # (Bb, TT, F)  residual + LN input
    hv = halo_ref[...].astype(jnp.float32)      # (Bb, 2*Ph, F)

    # Main tile + time halo in one slab; halo rows are recomputed through
    # LN/pconv1/GLU so the depthwise conv below needs no per-tap masking.
    x_ext = jnp.concatenate([hv[:, :Ph, :], x, hv[:, Ph:, :]], axis=1)  # (Bb,TT2,F)
    v = x_ext.reshape(Bb * TT2, F)              # pack rows -> MXU M dimension

    # ---- LayerNorm over features (single pass: E[x^2] - mean^2) -----------
    mean = jnp.mean(v, axis=-1, keepdims=True)
    var = jnp.maximum(jnp.mean(v * v, axis=-1, keepdims=True) - mean * mean, 0.0)
    xn = (v - mean) * lax.rsqrt(var + _EPS)
    xn = xn * ln_g_ref[...] + ln_b_ref[...]

    # ---- pointwise conv 1, pre-split into the two GLU halves --------------
    xb = xn.astype(jnp.bfloat16)
    a = jnp.dot(xb, w1a_ref[...], preferred_element_type=jnp.float32) + b1a_ref[...]
    g = jnp.dot(xb, w1g_ref[...], preferred_element_type=jnp.float32) + b1g_ref[...]
    h = a * jax.nn.sigmoid(g)                   # GLU
    h_ext = h.reshape(Bb, TT2, F)

    # Zero the halo rows that fall outside the sequence ('same' zero padding
    # applies to h, the depthwise conv input).  One cheap multiply, only the
    # first/last grid step ever masks anything.
    nt = pl.program_id(1)
    lo = jnp.where(nt == 0, Ph, 0)
    hi = jnp.where(nt == pl.num_programs(1) - 1, Ph + TT, TT2)
    ridx = lax.broadcasted_iota(jnp.int32, (TT2, 1), 0)
    keep = ((ridx >= lo) & (ridx < hi)).astype(jnp.float32)     # (TT2, 1)
    h_ext = h_ext * keep[None, :, :]

    # ---- depthwise conv over time (BatchNorm folded into dw/db) -----------
    dwv = dw_ref[...]                           # (K, F)
    y = jnp.zeros((Bb, TT, F), jnp.float32)
    for k in range(K):                          # static, small K
        s = Ph - P + k
        y = y + h_ext[:, s:s + TT, :] * dwv[k:k + 1, :][None]
    y = y + db_ref[...][None]

    # ---- Swish / SiLU -------------------------------------------------------
    y = y * jax.nn.sigmoid(y)

    # ---- pointwise conv 2 + residual (dropout = identity at inference) -----
    y2 = jnp.dot(y.reshape(Bb * TT, F).astype(jnp.bfloat16), w2_ref[...],
                 preferred_element_type=jnp.float32) + b2_ref[...]
    o_ref[...] = (y2.reshape(Bb, TT, F) + x).astype(o_ref.dtype)


def _choose_tiles(batch, seq, pad, feat, vmem_cap_bytes):
    """Pick (Bb, TT, Ph): time tile TT (multiple of 8, divides T, >= P) and
    batch packing Bb so Bb*TT ~ 256 rows, bounded by a crude VMEM budget."""
    divisors = [d for d in range(8, min(seq, 512) + 1, 8)
                if seq % d == 0 and d >= pad]
    tt = max(divisors) if divisors else seq        # fallback: whole sequence
    bb = 1
    if tt < 256:
        target = max(1, 256 // tt)
        bb = max(d for d in range(1, batch + 1) if batch % d == 0 and d <= target)
    ph = max(8, ((pad + 7) // 8) * 8)

    def footprint(bb_, tt_):          # ~16 live f32 copies of the extended tile
        return 16 * bb_ * (tt_ + 2 * ph) * feat * 4

    budget = vmem_cap_bytes // 2
    while bb > 1 and footprint(bb, tt) > budget:
        bb = max(d for d in range(1, bb) if batch % d == 0)
    while divisors and footprint(bb, tt) > budget:
        smaller = [d for d in divisors if d < tt]
        if not smaller:
            break
        tt = max(smaller)
    return bb, tt, ph


def conformer_conv(x, params, kernel_size):
    """x: (B, T, F) float32.
    params = (ln_g, ln_b, w1, b1, dw, db, bn_g, bn_b, bn_mean, bn_var, w2, b2)
    with the Conv1d weights already in matmul form: w1 (F, 2F), dw (K, F),
    w2 (F, F); vectors shaped (1, F) / (1, 2F)."""
    B, T, F = x.shape
    K = kernel_size
    assert K % 2 == 1, "module uses padding=(K-1)//2 -> odd kernel_size"
    P = (K - 1) // 2
    (ln_g, ln_b, w1, b1, dw, db, bn_g, bn_b, bn_mean, bn_var, w2, b2) = params

    # ---- one-time parameter transforms (outside the hot path) --------------
    # Fold eval-mode BatchNorm1d (running stats) into the depthwise conv.
    bn_scale = bn_g / jnp.sqrt(bn_var + _EPS)               # (1, F)
    dw_f = dw * bn_scale                                    # (K, F)
    db_f = (db - bn_mean) * bn_scale + bn_b                 # (1, F)
    # Split point_conv_1 into the two GLU halves (no lane slice at F).
    w1a = w1[:, :F].astype(jnp.bfloat16)
    w1g = w1[:, F:].astype(jnp.bfloat16)
    b1a, b1g = b1[:, :F], b1[:, F:]
    w2b = w2.astype(jnp.bfloat16)

    # ---- tiling (generation-aware VMEM budget) ------------------------------
    try:
        vmem_cap = int(pltpu.get_tpu_info().vmem_capacity_bytes)
    except Exception:                      # conservative default (v7x: 64 MiB)
        vmem_cap = 64 * 1024 * 1024
    Bb, TT, Ph = _choose_tiles(B, T, P, F, vmem_cap)
    assert P <= TT, "kernel_size too large for the chosen time tile"
    NT = T // TT

    # ---- time-halo slabs (P real rows per side from the neighbouring tile,
    # zeros at the sequence edges, padded to Ph rows per side for sublane
    # alignment).  This is ~2*Ph/TT of the activation tensor -> negligible.
    xb4 = x.reshape(B, NT, TT, F)
    zedge = jnp.zeros((B, 1, P, F), x.dtype)
    prev = jnp.concatenate([zedge, xb4[:, :-1, TT - P:, :]], axis=1)  # (B,NT,P,F)
    nxt = jnp.concatenate([xb4[:, 1:, :P, :], zedge], axis=1)         # (B,NT,P,F)
    zpad = jnp.zeros((B, NT, Ph - P, F), x.dtype)
    halo = jnp.concatenate([zpad, prev, nxt, zpad], axis=2)           # (B,NT,2Ph,F)
    halo = halo.reshape(B, NT * 2 * Ph, F)

    grid = (B // Bb, NT)
    x_spec = pl.BlockSpec((Bb, TT, F), lambda bi, ti: (bi, ti, 0))
    halo_spec = pl.BlockSpec((Bb, 2 * Ph, F), lambda bi, ti: (bi, ti, 0))
    wspec = lambda shape: pl.BlockSpec(shape, lambda bi, ti: (0, 0))

    kern = functools.partial(_conformer_conv_kernel,
                             kernel_size=K, halo_pad=Ph)

    # VMEM budget / cost hints.
    tile_f32 = Bb * (TT + 2 * Ph) * F * 4
    io_bytes = 2 * (2 * Bb * TT * F * 4 + Bb * 2 * Ph * F * 4)
    weight_bytes = 2 * (3 * F * F * 2 + (6 * F + K * F) * 4)
    vmem_est = io_bytes + weight_bytes + 12 * tile_f32
    vmem_limit = int(min(int(0.85 * vmem_cap),
                         max(32 * 1024 * 1024, 2 * vmem_est)))
    cost = pl.CostEstimate(
        flops=int(B * T * (6 * F * F + 2 * K * F + 15 * F)),
        transcendentals=int(2 * B * T * F),
        bytes_accessed=int(2 * B * T * F * 4 + B * NT * 2 * Ph * F * 4
                           + 3 * F * F * 2 + (6 * F + K * F) * 4))

    out = pl.pallas_call(
        kern,
        out_shape=jax.ShapeDtypeStruct((B, T, F), x.dtype),
        grid=grid,
        in_specs=[x_spec, halo_spec,
                  wspec((1, F)), wspec((1, F)),          # ln_g, ln_b
                  wspec((F, F)), wspec((F, F)),          # w1a, w1g (bf16)
                  wspec((1, F)), wspec((1, F)),          # b1a, b1g
                  wspec((K, F)), wspec((1, F)),          # dw, db (BN folded)
                  wspec((F, F)), wspec((1, F))],         # w2 (bf16), b2
        out_specs=x_spec,
        compiler_params=pltpu.CompilerParams(
            dimension_semantics=("parallel", "parallel"),
            vmem_limit_bytes=vmem_limit),
        cost_estimate=cost,
    )(x, halo, ln_g, ln_b, w1a, w1g, b1a, b1g, dw_f, db_f, w2b, b2)
    return out


def conformer_conv_ref(x, params, kernel_size):
    """Plain-JAX reference with the module's eval-mode semantics and the same
    mixed-precision policy (bf16 matmul operands, f32 accumulate/elementwise)."""
    B, T, F = x.shape
    K = kernel_size
    P = (K - 1) // 2
    (ln_g, ln_b, w1, b1, dw, db, bn_g, bn_b, bn_mean, bn_var, w2, b2) = params
    skip = x
    mean = x.mean(-1, keepdims=True)
    var = ((x - mean) ** 2).mean(-1, keepdims=True)
    xn = (x - mean) / jnp.sqrt(var + _EPS)
    xn = xn * ln_g.reshape(1, 1, F) + ln_b.reshape(1, 1, F)
    h = jnp.einsum('btf,fg->btg', xn.astype(jnp.bfloat16), w1.astype(jnp.bfloat16),
                   preferred_element_type=jnp.float32) + b1.reshape(1, 1, 2 * F)
    h = h[..., :F] * jax.nn.sigmoid(h[..., F:])                    # GLU
    hp = jnp.pad(h, ((0, 0), (P, P), (0, 0)))
    y = jnp.zeros((B, T, F), jnp.float32)
    for k in range(K):
        y = y + hp[:, k:k + T, :] * dw[k].reshape(1, 1, F)
    y = y + db.reshape(1, 1, F)
    y = (y - bn_mean.reshape(1, 1, F)) / jnp.sqrt(bn_var.reshape(1, 1, F) + _EPS)
    y = y * bn_g.reshape(1, 1, F) + bn_b.reshape(1, 1, F)
    y = y * jax.nn.sigmoid(y)                                       # SiLU
    y2 = jnp.einsum('btf,fg->btg', y.astype(jnp.bfloat16), w2.astype(jnp.bfloat16),
                    preferred_element_type=jnp.float32) + b2.reshape(1, 1, F)
    return y2 + skip


if __name__ == "__main__":
    B, T, F, K, EXP = 2, 16, 32, 7, 2   # batch, seq, num_features, kernel_size, exp_factor

    key = jax.random.PRNGKey(0)
    keys = jax.random.split(key, 14)

    x = jax.random.normal(keys[0], (B, T, F), jnp.float32)

    # Deterministic synthetic parameters (shapes per ConformerConv.__init__,
    # Conv1d weights pre-transposed to matmul form).
    ln_g = 1.0 + 0.1 * jax.random.normal(keys[1], (1, F), jnp.float32)
    ln_b = 0.1 * jax.random.normal(keys[2], (1, F), jnp.float32)
    w1 = jax.random.normal(keys[3], (F, EXP * F), jnp.float32) / math.sqrt(F)
    b1 = 0.05 * jax.random.normal(keys[4], (1, EXP * F), jnp.float32)
    dw = jax.random.normal(keys[5], (K, F), jnp.float32) / math.sqrt(K)
    db = 0.05 * jax.random.normal(keys[6], (1, F), jnp.float32)
    bn_g = 1.0 + 0.1 * jax.random.normal(keys[7], (1, F), jnp.float32)
    bn_b = 0.05 * jax.random.normal(keys[8], (1, F), jnp.float32)
    bn_mean = 0.1 * jax.random.normal(keys[9], (1, F), jnp.float32)
    bn_var = 1.0 + 0.2 * jnp.abs(jax.random.normal(keys[10], (1, F), jnp.float32))
    w2 = jax.random.normal(keys[11], (F, F), jnp.float32) / math.sqrt(F)
    b2 = 0.05 * jax.random.normal(keys[12], (1, F), jnp.float32)

    params = (ln_g, ln_b, w1, b1, dw, db, bn_g, bn_b, bn_mean, bn_var, w2, b2)

    out = jax.block_until_ready(conformer_conv(x, params, K))
    ref = conformer_conv_ref(x, params, K)

    assert out.shape == (B, T, F)
    max_err = float(jnp.max(jnp.abs(out - ref)))
    assert max_err < 2e-2, f"mismatch vs reference: max_err={max_err}"

    print("KERNEL_OK")
</pallas_src>

<mosaic_0001>
module attributes {stable_mosaic.version = 11 : i64} {
  func.func @_conformer_conv_kernel(%arg0: i32, %arg1: i32, %arg2: memref<2x16x32xf32, #tpu.memory_space<vmem>>, %arg3: memref<2x16x32xf32, #tpu.memory_space<vmem>>, %arg4: memref<1x32xf32, #tpu.memory_space<vmem>>, %arg5: memref<1x32xf32, #tpu.memory_space<vmem>>, %arg6: memref<32x32xbf16, #tpu.memory_space<vmem>>, %arg7: memref<32x32xbf16, #tpu.memory_space<vmem>>, %arg8: memref<1x32xf32, #tpu.memory_space<vmem>>, %arg9: memref<1x32xf32, #tpu.memory_space<vmem>>, %arg10: memref<7x32xf32, #tpu.memory_space<vmem>>, %arg11: memref<1x32xf32, #tpu.memory_space<vmem>>, %arg12: memref<32x32xbf16, #tpu.memory_space<vmem>>, %arg13: memref<1x32xf32, #tpu.memory_space<vmem>>, %arg14: memref<2x16x32xf32, #tpu.memory_space<vmem>>) attributes {dimension_semantics = [#tpu.dimension_semantics<parallel>, #tpu.dimension_semantics<parallel>], iteration_bounds = array<i64: 1, 1>, scalar_prefetch = 0 : i64, scratch_operands = 0 : i64, tpu.core_type = #tpu.core_type<tc>, window_params = [{transform_indices = @transform_0, window_bounds = array<i64: 2, 16, 32>}, {transform_indices = @transform_1, window_bounds = array<i64: 2, 16, 32>}, {pipeline_mode = #tpu.pipeline_mode<synchronous>, transform_indices = @transform_2, window_bounds = array<i64: 1, 32>}, {pipeline_mode = #tpu.pipeline_mode<synchronous>, transform_indices = @transform_3, window_bounds = array<i64: 1, 32>}, {pipeline_mode = #tpu.pipeline_mode<synchronous>, transform_indices = @transform_4, window_bounds = array<i64: 32, 32>}, {pipeline_mode = #tpu.pipeline_mode<synchronous>, transform_indices = @transform_5, window_bounds = array<i64: 32, 32>}, {pipeline_mode = #tpu.pipeline_mode<synchronous>, transform_indices = @transform_6, window_bounds = array<i64: 1, 32>}, {pipeline_mode = #tpu.pipeline_mode<synchronous>, transform_indices = @transform_7, window_bounds = array<i64: 1, 32>}, {pipeline_mode = #tpu.pipeline_mode<synchronous>, transform_indices = @transform_8, window_bounds = array<i64: 7, 32>}, {pipeline_mode = #tpu.pipeline_mode<synchronous>, transform_indices = @transform_9, window_bounds = array<i64: 1, 32>}, {pipeline_mode = #tpu.pipeline_mode<synchronous>, transform_indices = @transform_10, window_bounds = array<i64: 32, 32>}, {pipeline_mode = #tpu.pipeline_mode<synchronous>, transform_indices = @transform_11, window_bounds = array<i64: 1, 32>}, {transform_indices = @transform_12, window_bounds = array<i64: 2, 16, 32>}]} {
    %c0 = arith.constant 0 : index
    %c0_0 = arith.constant 0 : index
    %c0_1 = arith.constant 0 : index
    %0 = vector.load %arg2[%c0, %c0_0, %c0_1] : memref<2x16x32xf32, #tpu.memory_space<vmem>>, vector<2x16x32xf32>
    %c0_2 = arith.constant 0 : index
    %c0_3 = arith.constant 0 : index
    %c0_4 = arith.constant 0 : index
    %1 = vector.load %arg3[%c0_2, %c0_3, %c0_4] : memref<2x16x32xf32, #tpu.memory_space<vmem>>, vector<2x16x32xf32>
    %2 = vector.extract_strided_slice %1 {offsets = [0, 0, 0], sizes = [2, 8, 32], strides = [1, 1, 1]} : vector<2x16x32xf32> to vector<2x8x32xf32>
    %3 = vector.extract_strided_slice %1 {offsets = [0, 8, 0], sizes = [2, 8, 32], strides = [1, 1, 1]} : vector<2x16x32xf32> to vector<2x8x32xf32>
    %4 = tpu.concatenate %2, %0, %3 in 1 : vector<2x8x32xf32>, vector<2x16x32xf32>, vector<2x8x32xf32> -> vector<2x32x32xf32>
    %5 = vector.shape_cast %4 : vector<2x32x32xf32> to vector<64x32xf32>
    %cst = arith.constant dense<0.000000e+00> : vector<64xf32>
    %6 = vector.multi_reduction <add>, %5, %cst [1] : vector<64x32xf32> to vector<64xf32>
    %7 = vector.shape_cast %6 : vector<64xf32> to vector<64x1xf32>
    %cst_5 = arith.constant 3.200000e+01 : f32
    %8 = vector.broadcast %cst_5 : f32 to vector<64x1xf32>
    %9 = arith.divf %7, %8 : vector<64x1xf32>
    %10 = arith.mulf %5, %5 : vector<64x32xf32>
    %cst_6 = arith.constant dense<0.000000e+00> : vector<64xf32>
    %11 = vector.multi_reduction <add>, %10, %cst_6 [1] : vector<64x32xf32> to vector<64xf32>
    %12 = vector.shape_cast %11 : vector<64xf32> to vector<64x1xf32>
    %cst_7 = arith.constant 3.200000e+01 : f32
    %13 = vector.broadcast %cst_7 : f32 to vector<64x1xf32>
    %14 = arith.divf %12, %13 : vector<64x1xf32>
    %15 = arith.mulf %9, %9 : vector<64x1xf32>
    %16 = arith.subf %14, %15 : vector<64x1xf32>
    %cst_8 = arith.constant 0.000000e+00 : f32
    %17 = vector.broadcast %cst_8 : f32 to vector<64x1xf32>
    %18 = arith.maximumf %16, %17 : vector<64x1xf32>
    %19 = vector.broadcast %9 : vector<64x1xf32> to vector<64x32xf32>
    %20 = arith.subf %5, %19 : vector<64x32xf32>
    %cst_9 = arith.constant 9.99999974E-6 : f32
    %21 = vector.broadcast %cst_9 : f32 to vector<64x1xf32>
    %22 = arith.addf %18, %21 : vector<64x1xf32>
    %23 = math.rsqrt %22 : vector<64x1xf32>
    %24 = vector.broadcast %23 : vector<64x1xf32> to vector<64x32xf32>
    %25 = arith.mulf %20, %24 : vector<64x32xf32>
    %c0_10 = arith.constant 0 : index
    %c0_11 = arith.constant 0 : index
    %26 = vector.load %arg4[%c0_10, %c0_11] : memref<1x32xf32, #tpu.memory_space<vmem>>, vector<1x32xf32>
    %27 = vector.broadcast %26 : vector<1x32xf32> to vector<64x32xf32>
    %28 = arith.mulf %25, %27 : vector<64x32xf32>
    %c0_12 = arith.constant 0 : index
    %c0_13 = arith.constant 0 : index
    %29 = vector.load %arg5[%c0_12, %c0_13] : memref<1x32xf32, #tpu.memory_space<vmem>>, vector<1x32xf32>
    %30 = vector.broadcast %29 : vector<1x32xf32> to vector<64x32xf32>
    %31 = arith.addf %28, %30 : vector<64x32xf32>
    %32 = arith.truncf %31 : vector<64x32xf32> to vector<64x32xbf16>
    %c0_14 = arith.constant 0 : index
    %c0_15 = arith.constant 0 : index
    %33 = vector.load %arg6[%c0_14, %c0_15] : memref<32x32xbf16, #tpu.memory_space<vmem>>, vector<32x32xbf16>
    %cst_16 = arith.constant dense<0.000000e+00> : vector<64x32xf32>
    %34 = tpu.matmul %32, %33, %cst_16 {dimension_numbers = #tpu.dot_dimension_numbers<[1], [0], [0], [1], [0, 0, 1, 1], [], []>} : vector<64x32xbf16>, vector<32x32xbf16>, vector<64x32xf32> -> vector<64x32xf32>
    %c0_17 = arith.constant 0 : index
    %c0_18 = arith.constant 0 : index
    %35 = vector.load %arg8[%c0_17, %c0_18] : memref<1x32xf32, #tpu.memory_space<vmem>>, vector<1x32xf32>
    %36 = vector.broadcast %35 : vector<1x32xf32> to vector<64x32xf32>
    %37 = arith.addf %34, %36 : vector<64x32xf32>
    %c0_19 = arith.constant 0 : index
    %c0_20 = arith.constant 0 : index
    %38 = vector.load %arg7[%c0_19, %c0_20] : memref<32x32xbf16, #tpu.memory_space<vmem>>, vector<32x32xbf16>
    %cst_21 = arith.constant dense<0.000000e+00> : vector<64x32xf32>
    %39 = tpu.matmul %32, %38, %cst_21 {dimension_numbers = #tpu.dot_dimension_numbers<[1], [0], [0], [1], [0, 0, 1, 1], [], []>} : vector<64x32xbf16>, vector<32x32xbf16>, vector<64x32xf32> -> vector<64x32xf32>
    %c0_22 = arith.constant 0 : index
    %c0_23 = arith.constant 0 : index
    %40 = vector.load %arg9[%c0_22, %c0_23] : memref<1x32xf32, #tpu.memory_space<vmem>>, vector<1x32xf32>
    %41 = vector.broadcast %40 : vector<1x32xf32> to vector<64x32xf32>
    %42 = arith.addf %39, %41 : vector<64x32xf32>
    %43 = arith.negf %42 : vector<64x32xf32>
    %44 = math.exp %43 : vector<64x32xf32>
    %cst_24 = arith.constant 1.000000e+00 : f32
    %45 = vector.broadcast %cst_24 : f32 to vector<64x32xf32>
    %46 = arith.addf %45, %44 : vector<64x32xf32>
    %47 = arith.divf %45, %46 : vector<64x32xf32>
    %48 = arith.mulf %37, %47 : vector<64x32xf32>
    %49 = vector.shape_cast %48 : vector<64x32xf32> to vector<2x32x32xf32>
    %c0_i32 = arith.constant 0 : i32
    %50 = arith.cmpi eq, %arg1, %c0_i32 : i32
    %c8_i32 = arith.constant 8 : i32
    %c0_i32_25 = arith.constant 0 : i32
    %51 = arith.select %50, %c8_i32, %c0_i32_25 : i32
    %c0_i32_26 = arith.constant 0 : i32
    %52 = arith.cmpi eq, %arg1, %c0_i32_26 : i32
    %c24_i32 = arith.constant 24 : i32
    %c32_i32 = arith.constant 32 : i32
    %53 = arith.select %52, %c24_i32, %c32_i32 : i32
    %54 = tpu.iota {dimensions = array<i32: 0>} : vector<32x1xi32>
    %55 = vector.broadcast %51 : i32 to vector<32x1xi32>
    %56 = arith.cmpi sge, %54, %55 : vector<32x1xi32>
    %57 = vector.broadcast %53 : i32 to vector<32x1xi32>
    %58 = arith.cmpi slt, %54, %57 : vector<32x1xi32>
    %59 = arith.andi %56, %58 : vector<32x1xi1>
    %60 = arith.extui %59 : vector<32x1xi1> to vector<32x1xi32>
    %61 = arith.sitofp %60 : vector<32x1xi32> to vector<32x1xf32>
    %62 = vector.shape_cast %61 : vector<32x1xf32> to vector<1x32x1xf32>
    %63 = vector.broadcast %62 : vector<1x32x1xf32> to vector<2x32x32xf32>
    %64 = arith.mulf %49, %63 : vector<2x32x32xf32>
    %c0_27 = arith.constant 0 : index
    %c0_28 = arith.constant 0 : index
    %65 = vector.load %arg10[%c0_27, %c0_28] : memref<7x32xf32, #tpu.memory_space<vmem>>, vector<7x32xf32>
    %cst_29 = arith.constant 0.000000e+00 : f32
    %66 = vector.broadcast %cst_29 : f32 to vector<2x16x32xf32>
    %67 = vector.extract_strided_slice %64 {offsets = [0, 5, 0], sizes = [2, 16, 32], strides = [1, 1, 1]} : vector<2x32x32xf32> to vector<2x16x32xf32>
    %68 = vector.extract_strided_slice %65 {offsets = [0, 0], sizes = [1, 32], strides = [1, 1]} : vector<7x32xf32> to vector<1x32xf32>
    %69 = vector.shape_cast %68 : vector<1x32xf32> to vector<1x1x32xf32>
    %70 = vector.broadcast %69 : vector<1x1x32xf32> to vector<2x16x32xf32>
    %71 = arith.mulf %67, %70 : vector<2x16x32xf32>
    %72 = arith.addf %66, %71 : vector<2x16x32xf32>
    %73 = vector.extract_strided_slice %64 {offsets = [0, 6, 0], sizes = [2, 16, 32], strides = [1, 1, 1]} : vector<2x32x32xf32> to vector<2x16x32xf32>
    %74 = vector.extract_strided_slice %65 {offsets = [1, 0], sizes = [1, 32], strides = [1, 1]} : vector<7x32xf32> to vector<1x32xf32>
    %75 = vector.shape_cast %74 : vector<1x32xf32> to vector<1x1x32xf32>
    %76 = vector.broadcast %75 : vector<1x1x32xf32> to vector<2x16x32xf32>
    %77 = arith.mulf %73, %76 : vector<2x16x32xf32>
    %78 = arith.addf %72, %77 : vector<2x16x32xf32>
    %79 = vector.extract_strided_slice %64 {offsets = [0, 7, 0], sizes = [2, 16, 32], strides = [1, 1, 1]} : vector<2x32x32xf32> to vector<2x16x32xf32>
    %80 = vector.extract_strided_slice %65 {offsets = [2, 0], sizes = [1, 32], strides = [1, 1]} : vector<7x32xf32> to vector<1x32xf32>
    %81 = vector.shape_cast %80 : vector<1x32xf32> to vector<1x1x32xf32>
    %82 = vector.broadcast %81 : vector<1x1x32xf32> to vector<2x16x32xf32>
    %83 = arith.mulf %79, %82 : vector<2x16x32xf32>
    %84 = arith.addf %78, %83 : vector<2x16x32xf32>
    %85 = vector.extract_strided_slice %64 {offsets = [0, 8, 0], sizes = [2, 16, 32], strides = [1, 1, 1]} : vector<2x32x32xf32> to vector<2x16x32xf32>
    %86 = vector.extract_strided_slice %65 {offsets = [3, 0], sizes = [1, 32], strides = [1, 1]} : vector<7x32xf32> to vector<1x32xf32>
    %87 = vector.shape_cast %86 : vector<1x32xf32> to vector<1x1x32xf32>
    %88 = vector.broadcast %87 : vector<1x1x32xf32> to vector<2x16x32xf32>
    %89 = arith.mulf %85, %88 : vector<2x16x32xf32>
    %90 = arith.addf %84, %89 : vector<2x16x32xf32>
    %91 = vector.extract_strided_slice %64 {offsets = [0, 9, 0], sizes = [2, 16, 32], strides = [1, 1, 1]} : vector<2x32x32xf32> to vector<2x16x32xf32>
    %92 = vector.extract_strided_slice %65 {offsets = [4, 0], sizes = [1, 32], strides = [1, 1]} : vector<7x32xf32> to vector<1x32xf32>
    %93 = vector.shape_cast %92 : vector<1x32xf32> to vector<1x1x32xf32>
    %94 = vector.broadcast %93 : vector<1x1x32xf32> to vector<2x16x32xf32>
    %95 = arith.mulf %91, %94 : vector<2x16x32xf32>
    %96 = arith.addf %90, %95 : vector<2x16x32xf32>
    %97 = vector.extract_strided_slice %64 {offsets = [0, 10, 0], sizes = [2, 16, 32], strides = [1, 1, 1]} : vector<2x32x32xf32> to vector<2x16x32xf32>
    %98 = vector.extract_strided_slice %65 {offsets = [5, 0], sizes = [1, 32], strides = [1, 1]} : vector<7x32xf32> to vector<1x32xf32>
    %99 = vector.shape_cast %98 : vector<1x32xf32> to vector<1x1x32xf32>
    %100 = vector.broadcast %99 : vector<1x1x32xf32> to vector<2x16x32xf32>
    %101 = arith.mulf %97, %100 : vector<2x16x32xf32>
    %102 = arith.addf %96, %101 : vector<2x16x32xf32>
    %103 = vector.extract_strided_slice %64 {offsets = [0, 11, 0], sizes = [2, 16, 32], strides = [1, 1, 1]} : vector<2x32x32xf32> to vector<2x16x32xf32>
    %104 = vector.extract_strided_slice %65 {offsets = [6, 0], sizes = [1, 32], strides = [1, 1]} : vector<7x32xf32> to vector<1x32xf32>
    %105 = vector.shape_cast %104 : vector<1x32xf32> to vector<1x1x32xf32>
    %106 = vector.broadcast %105 : vector<1x1x32xf32> to vector<2x16x32xf32>
    %107 = arith.mulf %103, %106 : vector<2x16x32xf32>
    %108 = arith.addf %102, %107 : vector<2x16x32xf32>
    %c0_30 = arith.constant 0 : index
    %c0_31 = arith.constant 0 : index
    %109 = vector.load %arg11[%c0_30, %c0_31] : memref<1x32xf32, #tpu.memory_space<vmem>>, vector<1x32xf32>
    %110 = vector.shape_cast %109 : vector<1x32xf32> to vector<1x1x32xf32>
    %111 = vector.broadcast %110 : vector<1x1x32xf32> to vector<2x16x32xf32>
    %112 = arith.addf %108, %111 : vector<2x16x32xf32>
    %113 = arith.negf %112 : vector<2x16x32xf32>
    %114 = math.exp %113 : vector<2x16x32xf32>
    %cst_32 = arith.constant 1.000000e+00 : f32
    %115 = vector.broadcast %cst_32 : f32 to vector<2x16x32xf32>
    %116 = arith.addf %115, %114 : vector<2x16x32xf32>
    %117 = arith.divf %115, %116 : vector<2x16x32xf32>
    %118 = arith.mulf %112, %117 : vector<2x16x32xf32>
    %119 = vector.shape_cast %118 : vector<2x16x32xf32> to vector<32x32xf32>
    %120 = arith.truncf %119 : vector<32x32xf32> to vector<32x32xbf16>
    %c0_33 = arith.constant 0 : index
    %c0_34 = arith.constant 0 : index
    %121 = vector.load %arg12[%c0_33, %c0_34] : memref<32x32xbf16, #tpu.memory_space<vmem>>, vector<32x32xbf16>
    %cst_35 = arith.constant dense<0.000000e+00> : vector<32x32xf32>
    %122 = tpu.matmul %120, %121, %cst_35 {dimension_numbers = #tpu.dot_dimension_numbers<[1], [0], [0], [1], [0, 0, 1, 1], [], []>} : vector<32x32xbf16>, vector<32x32xbf16>, vector<32x32xf32> -> vector<32x32xf32>
    %c0_36 = arith.constant 0 : index
    %c0_37 = arith.constant 0 : index
    %123 = vector.load %arg13[%c0_36, %c0_37] : memref<1x32xf32, #tpu.memory_space<vmem>>, vector<1x32xf32>
    %124 = vector.broadcast %123 : vector<1x32xf32> to vector<32x32xf32>
    %125 = arith.addf %122, %124 : vector<32x32xf32>
    %126 = vector.shape_cast %125 : vector<32x32xf32> to vector<2x16x32xf32>
    %127 = arith.addf %126, %0 : vector<2x16x32xf32>
    %c0_38 = arith.constant 0 : index
    %c0_39 = arith.constant 0 : index
    %c0_40 = arith.constant 0 : index
    %128 = vector.load %arg14[%c0_38, %c0_39, %c0_40] : memref<2x16x32xf32, #tpu.memory_space<vmem>>, vector<2x16x32xf32>
    tpu.vector_store %arg14[%c0_38, %c0_39, %c0_40], %127 {strides = array<i32>} : memref<2x16x32xf32, #tpu.memory_space<vmem>>, vector<2x16x32xf32>,
    return
  }
  func.func @transform_0(%arg0: i32, %arg1: i32) -> (i32, i32, i32) {
    %c0_i32 = arith.constant 0 : i32
    %c0_i32_0 = arith.constant 0 : i32
    return %arg0, %arg1, %c0_i32 : i32, i32, i32
  }
  func.func @transform_1(%arg0: i32, %arg1: i32) -> (i32, i32, i32) {
    %c0_i32 = arith.constant 0 : i32
    %c0_i32_0 = arith.constant 0 : i32
    return %arg0, %arg1, %c0_i32 : i32, i32, i32
  }
  func.func @transform_2(%arg0: i32, %arg1: i32) -> (i32, i32) {
    %c0_i32 = arith.constant 0 : i32
    %c0_i32_0 = arith.constant 0 : i32
    %c0_i32_1 = arith.constant 0 : i32
    return %c0_i32, %c0_i32_0 : i32, i32
  }
  func.func @transform_3(%arg0: i32, %arg1: i32) -> (i32, i32) {
    %c0_i32 = arith.constant 0 : i32
    %c0_i32_0 = arith.constant 0 : i32
    %c0_i32_1 = arith.constant 0 : i32
    return %c0_i32, %c0_i32_0 : i32, i32
  }
  func.func @transform_4(%arg0: i32, %arg1: i32) -> (i32, i32) {
    %c0_i32 = arith.constant 0 : i32
    %c0_i32_0 = arith.constant 0 : i32
    %c0_i32_1 = arith.constant 0 : i32
    return %c0_i32, %c0_i32_0 : i32, i32
  }
  func.func @transform_5(%arg0: i32, %arg1: i32) -> (i32, i32) {
    %c0_i32 = arith.constant 0 : i32
    %c0_i32_0 = arith.constant 0 : i32
    %c0_i32_1 = arith.constant 0 : i32
    return %c0_i32, %c0_i32_0 : i32, i32
  }
  func.func @transform_6(%arg0: i32, %arg1: i32) -> (i32, i32) {
    %c0_i32 = arith.constant 0 : i32
    %c0_i32_0 = arith.constant 0 : i32
    %c0_i32_1 = arith.constant 0 : i32
    return %c0_i32, %c0_i32_0 : i32, i32
  }
  func.func @transform_7(%arg0: i32, %arg1: i32) -> (i32, i32) {
    %c0_i32 = arith.constant 0 : i32
    %c0_i32_0 = arith.constant 0 : i32
    %c0_i32_1 = arith.constant 0 : i32
    return %c0_i32, %c0_i32_0 : i32, i32
  }
  func.func @transform_8(%arg0: i32, %arg1: i32) -> (i32, i32) {
    %c0_i32 = arith.constant 0 : i32
    %c0_i32_0 = arith.constant 0 : i32
    %c0_i32_1 = arith.constant 0 : i32
    return %c0_i32, %c0_i32_0 : i32, i32
  }
  func.func @transform_9(%arg0: i32, %arg1: i32) -> (i32, i32) {
    %c0_i32 = arith.constant 0 : i32
    %c0_i32_0 = arith.constant 0 : i32
    %c0_i32_1 = arith.constant 0 : i32
    return %c0_i32, %c0_i32_0 : i32, i32
  }
  func.func @transform_10(%arg0: i32, %arg1: i32) -> (i32, i32) {
    %c0_i32 = arith.constant 0 : i32
    %c0_i32_0 = arith.constant 0 : i32
    %c0_i32_1 = arith.constant 0 : i32
    return %c0_i32, %c0_i32_0 : i32, i32
  }
  func.func @transform_11(%arg0: i32, %arg1: i32) -> (i32, i32) {
    %c0_i32 = arith.constant 0 : i32
    %c0_i32_0 = arith.constant 0 : i32
    %c0_i32_1 = arith.constant 0 : i32
    return %c0_i32, %c0_i32_0 : i32, i32
  }
  func.func @transform_12(%arg0: i32, %arg1: i32) -> (i32, i32, i32) {
    %c0_i32 = arith.constant 0 : i32
    %c0_i32_0 = arith.constant 0 : i32
    return %arg0, %arg1, %c0_i32 : i32, i32, i32
  }
}

</mosaic_0001>

<llo_original>
// kernel: tpu_custom_call.1
$region0: #{tpu_custom_call.1}
  #allocation0 [shape = 'u32[]', space=smem, size = 0x4, offset = 0x4, fixed_abs, tag = 'smem constant byte address 0x4 - core index']
  #allocation1 [shape = 'u32[144,128]{1,0:T(1,128)}', space=vmem, size = 0x12000, scoped, tag = 'internal scratch']
  %s0 = inlined_call_operand.hbm [shape: f32[2,16,32], index: 0, kind: input, shape index: {}]
  %s1 = inlined_call_operand.hbm [shape: f32[2,16,32], index: 1, kind: input, shape index: {}]
  %s2 = inlined_call_operand.vmem [shape: f32[1,32], index: 2, kind: input, shape index: {}]
  %s3 = inlined_call_operand.vmem [shape: f32[1,32], index: 3, kind: input, shape index: {}]
  %s4 = inlined_call_operand.hbm [shape: bf16[32,32], index: 4, kind: input, shape index: {}]
  %s5 = inlined_call_operand.hbm [shape: bf16[32,32], index: 5, kind: input, shape index: {}]
  %s6 = inlined_call_operand.hbm [shape: f32[1,32], index: 6, kind: input, shape index: {}]
  %s7 = inlined_call_operand.hbm [shape: f32[1,32], index: 7, kind: input, shape index: {}]
  %s8 = inlined_call_operand.hbm [shape: f32[7,32], index: 8, kind: input, shape index: {}]
  %s9 = inlined_call_operand.hbm [shape: f32[1,32], index: 9, kind: input, shape index: {}]
  %s10 = inlined_call_operand.vmem [shape: bf16[32,32], index: 10, kind: input, shape index: {}]
  %s11 = inlined_call_operand.vmem [shape: f32[1,32], index: 11, kind: input, shape index: {}]
  %s12 = inlined_call_operand.hbm [shape: f32[2,16,32], index: 12, kind: output, shape index: {}]
  %s13 = sld [smem:[#allocation0]]
  $region90: #{tpu_custom_call.1} parent=0
    _
  %s15 = ssub.s32 1, %s13
  %s16 = scalar_select 0, %s15, %s13
  $region1: #{tpu_custom_call.1} parent=0
    #allocation2 [shape = 'u8[16384]{0}', space=vmem, size = 0x4000, scoped, tag = 'input window, operand 0, single buffered']
    #allocation3 [shape = 's32[1]{0}', space=sflag, size = 0x4, scoped, tag = 'scoped memory for tpu_custom_call.1']
    #allocation4 [shape = 's32[1]{0}', space=sflag, size = 0x4, scoped, tag = 'scoped memory for tpu_custom_call.1']
    #allocation5 [shape = 'u8[16384]{0}', space=vmem, size = 0x4000, scoped, tag = 'input window, operand 1, single buffered']
    #allocation6 [shape = 's32[1]{0}', space=sflag, size = 0x4, scoped, tag = 'scoped memory for tpu_custom_call.1']
    #allocation7 [shape = 'u8[8192]{0}', space=vmem, size = 0x2000, scoped, tag = 'input window, operand 4, single buffered']
    #allocation8 [shape = 'u8[8192]{0}', space=vmem, size = 0x2000, scoped, tag = 'input window, operand 5, single buffered']
    #allocation9 [shape = 's32[1]{0}', space=sflag, size = 0x4, scoped, tag = 'scoped memory for tpu_custom_call.1']
    #allocation10 [shape = 'u8[512]{0}', space=vmem, size = 0x400, scoped, tag = 'input window, operand 6, single buffered']
    #allocation11 [shape = 'u8[512]{0}', space=vmem, size = 0x400, scoped, tag = 'input window, operand 7, single buffered']
    #allocation12 [shape = 's32[1]{0}', space=sflag, size = 0x4, scoped, tag = 'scoped memory for tpu_custom_call.1']
    #allocation13 [shape = 'u8[4096]{0}', space=vmem, size = 0x1000, scoped, tag = 'input window, operand 8, single buffered']
    #allocation14 [shape = 'u8[512]{0}', space=vmem, size = 0x400, scoped, tag = 'input window, operand 9, single buffered']
    #allocation15 [shape = 's32[1]{0}', space=sflag, size = 0x4, scoped, tag = 'scoped memory for tpu_custom_call.1']
    #allocation16 [shape = 'u8[16384]{0}', space=vmem, size = 0x4000, scoped, tag = 'output window, operand 0, single buffered']
    %17 = vsyncpa [#allocation3], 0
    %18 = vsyncpa [#allocation6], 0
    %19 = vsyncpa [#allocation9], 0
    %20 = vsyncpa [#allocation12], 0
    %21 = vsyncpa [#allocation15], 0
    %22 = vsyncpa [#allocation4], 0
    // Predicated region
    $region2: #{tpu_custom_call.1} parent=1 // pred_check
      _
    $region3: #{tpu_custom_call.1} parent=1 // pred_check_branch
      %24 = sbr.rel (0) target = $region5
    $region4: #{tpu_custom_call.1} parent=1 // pred_region
      %s26 = ssub.s32 512, 512
      %27 = vsyncadd [#allocation3], %s26
      %s28 = sshll.u32 [#allocation2], 4
      %s29 = int_to_ptr.vmem [resolvable:$true] %s28
      %34 = dma.hbm_to_vmem [thread:$0]  %s0, 512, %s29, [#allocation3], 128, 128, 8
    $region5: #{tpu_custom_call.1} parent=1 // pred_fallthru
      _
    // Predicated region
    $region6: #{tpu_custom_call.1} parent=1 // pred_check
      _
    $region7: #{tpu_custom_call.1} parent=1 // pred_check_branch
      %36 = sbr.rel (0) target = $region9
    $region8: #{tpu_custom_call.1} parent=1 // pred_region
      %s38 = ssub.s32 512, 512
      %39 = vsyncadd [#allocation6], %s38
      %s40 = sshll.u32 [#allocation5], 4
      %s41 = int_to_ptr.vmem [resolvable:$true] %s40
      %46 = dma.hbm_to_vmem [thread:$0]  %s1, 512, %s41, [#allocation6], 128, 128, 8
    $region9: #{tpu_custom_call.1} parent=1 // pred_fallthru
      _
    // Predicated region
    $region10: #{tpu_custom_call.1} parent=1 // pred_check
      _
    $region11: #{tpu_custom_call.1} parent=1 // pred_check_branch
      %48 = sbr.rel (0) target = $region13
    $region12: #{tpu_custom_call.1} parent=1 // pred_region
      _
    $region13: #{tpu_custom_call.1} parent=1 // pred_fallthru
      _
    // Predicated region
    $region14: #{tpu_custom_call.1} parent=1 // pred_check
      _
    $region15: #{tpu_custom_call.1} parent=1 // pred_check_branch
      %50 = sbr.rel (0) target = $region17
    $region16: #{tpu_custom_call.1} parent=1 // pred_region
      _
    $region17: #{tpu_custom_call.1} parent=1 // pred_fallthru
      _
    // Predicated region
    $region18: #{tpu_custom_call.1} parent=1 // pred_check
      _
    $region19: #{tpu_custom_call.1} parent=1 // pred_check_branch
      %52 = sbr.rel (0) target = $region21
    $region20: #{tpu_custom_call.1} parent=1 // pred_region
      %s54 = ssub.s32 256, 256
      %55 = vsyncadd [#allocation6], %s54
      %s56 = sshll.u32 [#allocation7], 4
      %s57 = int_to_ptr.vmem [resolvable:$true] %s56
      %62 = dma.hbm_to_vmem [thread:$0]  %s4, 256, %s57, [#allocation6], 64, 64, 4
    $region21: #{tpu_custom_call.1} parent=1 // pred_fallthru
      _
    // Predicated region
    $region22: #{tpu_custom_call.1} parent=1 // pred_check
      _
    $region23: #{tpu_custom_call.1} parent=1 // pred_check_branch
      %64 = sbr.rel (0) target = $region25
    $region24: #{tpu_custom_call.1} parent=1 // pred_region
      %s66 = ssub.s32 256, 256
      %67 = vsyncadd [#allocation9], %s66
      %s68 = sshll.u32 [#allocation8], 4
      %s69 = int_to_ptr.vmem [resolvable:$true] %s68
      %74 = dma.hbm_to_vmem [thread:$0]  %s5, 256, %s69, [#allocation9], 64, 64, 4
    $region25: #{tpu_custom_call.1} parent=1 // pred_fallthru
      _
    // Predicated region
    $region26: #{tpu_custom_call.1} parent=1 // pred_check
      _
    $region27: #{tpu_custom_call.1} parent=1 // pred_check_branch
      %76 = sbr.rel (0) target = $region29
    $region28: #{tpu_custom_call.1} parent=1 // pred_region
      %s78 = ssub.s32 16, 16
      %79 = vsyncadd [#allocation9], %s78
      %s81 = sshll.u32 [#allocation10], 4
      %s82 = int_to_ptr.vmem [resolvable:$true] %s81
      %84 = dma.hbm_to_vmem [thread:$0]  %s6, 16, %s82, [#allocation9]
    $region29: #{tpu_custom_call.1} parent=1 // pred_fallthru
      _
    // Predicated region
    $region30: #{tpu_custom_call.1} parent=1 // pred_check
      _
    $region31: #{tpu_custom_call.1} parent=1 // pred_check_branch
      %86 = sbr.rel (0) target = $region33
    $region32: #{tpu_custom_call.1} parent=1 // pred_region
      %s88 = ssub.s32 16, 16
      %89 = vsyncadd [#allocation12], %s88
      %s91 = sshll.u32 [#allocation11], 4
      %s92 = int_to_ptr.vmem [resolvable:$true] %s91
      %94 = dma.hbm_to_vmem [thread:$0]  %s7, 16, %s92, [#allocation12]
    $region33: #{tpu_custom_call.1} parent=1 // pred_fallthru
      _
    // Predicated region
    $region34: #{tpu_custom_call.1} parent=1 // pred_check
      _
    $region35: #{tpu_custom_call.1} parent=1 // pred_check_branch
      %96 = sbr.rel (0) target = $region37
    $region36: #{tpu_custom_call.1} parent=1 // pred_region
      %s98 = ssub.s32 128, 128
      %99 = vsyncadd [#allocation12], %s98
      %s101 = sshll.u32 [#allocation13], 4
      %s102 = int_to_ptr.vmem [resolvable:$true] %s101
      %104 = dma.hbm_to_vmem [thread:$0]  %s8, 128, %s102, [#allocation12]
    $region37: #{tpu_custom_call.1} parent=1 // pred_fallthru
      _
    // Predicated region
    $region38: #{tpu_custom_call.1} parent=1 // pred_check
      _
    $region39: #{tpu_custom_call.1} parent=1 // pred_check_branch
      %106 = sbr.rel (0) target = $region41
    $region40: #{tpu_custom_call.1} parent=1 // pred_region
      %s108 = ssub.s32 16, 16
      %109 = vsyncadd [#allocation15], %s108
      %s111 = sshll.u32 [#allocation14], 4
      %s112 = int_to_ptr.vmem [resolvable:$true] %s111
      %114 = dma.hbm_to_vmem [thread:$0]  %s9, 16, %s112, [#allocation15]
    $region41: #{tpu_custom_call.1} parent=1 // pred_fallthru
      _
    // Predicated region
    $region42: #{tpu_custom_call.1} parent=1 // pred_check
      _
    $region43: #{tpu_custom_call.1} parent=1 // pred_check_branch
      %116 = sbr.rel (0) target = $region45
    $region44: #{tpu_custom_call.1} parent=1 // pred_region
      _
    $region45: #{tpu_custom_call.1} parent=1 // pred_fallthru
      _
    // Predicated region
    $region46: #{tpu_custom_call.1} parent=1 // pred_check
      _
    $region47: #{tpu_custom_call.1} parent=1 // pred_check_branch
      %118 = sbr.rel (0) target = $region49
    $region48: #{tpu_custom_call.1} parent=1 // pred_region
      _
    $region49: #{tpu_custom_call.1} parent=1 // pred_fallthru
      _
    // Predicated region
    $region50: #{tpu_custom_call.1} parent=1 // pred_check
      _
    $region51: #{tpu_custom_call.1} parent=1 // pred_check_branch
      %120 = sbr.rel (0) target = $region53
    $region52: #{tpu_custom_call.1} parent=1 // pred_region
      %121 = dma.done [#allocation3], 512
    $region53: #{tpu_custom_call.1} parent=1 // pred_fallthru
      _
    // Predicated region
    $region54: #{tpu_custom_call.1} parent=1 // pred_check
      _
    $region55: #{tpu_custom_call.1} parent=1 // pred_check_branch
      %123 = sbr.rel (0) target = $region57
    $region56: #{tpu_custom_call.1} parent=1 // pred_region
      %124 = dma.done [#allocation6], 512
    $region57: #{tpu_custom_call.1} parent=1 // pred_fallthru
      _
    // Predicated region
    $region58: #{tpu_custom_call.1} parent=1 // pred_check
      _
    $region59: #{tpu_custom_call.1} parent=1 // pred_check_branch
      %126 = sbr.rel (0) target = $region61
    $region60: #{tpu_custom_call.1} parent=1 // pred_region
      %127 = dma.done [#allocation6], 256
    $region61: #{tpu_custom_call.1} parent=1 // pred_fallthru
      _
    // Predicated region
    $region62: #{tpu_custom_call.1} parent=1 // pred_check
      _
    $region63: #{tpu_custom_call.1} parent=1 // pred_check_branch
      %129 = sbr.rel (0) target = $region65
    $region64: #{tpu_custom_call.1} parent=1 // pred_region
      %130 = dma.done [#allocation9], 256
    $region65: #{tpu_custom_call.1} parent=1 // pred_fallthru
      _
    // Predicated region
    $region66: #{tpu_custom_call.1} parent=1 // pred_check
      _
    $region67: #{tpu_custom_call.1} parent=1 // pred_check_branch
      %132 = sbr.rel (0) target = $region69
    $region68: #{tpu_custom_call.1} parent=1 // pred_region
      %133 = dma.done [#allocation9], 16
    $region69: #{tpu_custom_call.1} parent=1 // pred_fallthru
      _
    // Predicated region
    $region70: #{tpu_custom_call.1} parent=1 // pred_check
      _
    $region71: #{tpu_custom_call.1} parent=1 // pred_check_branch
      %135 = sbr.rel (0) target = $region73
    $region72: #{tpu_custom_call.1} parent=1 // pred_region
      %136 = dma.done [#allocation12], 16
    $region73: #{tpu_custom_call.1} parent=1 // pred_fallthru
      _
    // Predicated region
    $region74: #{tpu_custom_call.1} parent=1 // pred_check
      _
    $region75: #{tpu_custom_call.1} parent=1 // pred_check_branch
      %138 = sbr.rel (0) target = $region77
    $region76: #{tpu_custom_call.1} parent=1 // pred_region
      %139 = dma.done [#allocation12], 128
    $region77: #{tpu_custom_call.1} parent=1 // pred_fallthru
      _
    // Predicated region
    $region78: #{tpu_custom_call.1} parent=1 // pred_check
      _
    $region79: #{tpu_custom_call.1} parent=1 // pred_check_branch
      %141 = sbr.rel (0) target = $region81
    $region80: #{tpu_custom_call.1} parent=1 // pred_region
      %142 = dma.done [#allocation15], 16
    $region81: #{tpu_custom_call.1} parent=1 // pred_fallthru
      _
    %v144 = vld [vmem:[#allocation2] sm:$0xff]
    %v145 = vld [vmem:[#allocation2 + $0x8] sm:$0xff]
    %v146 = vld [vmem:[#allocation2 + $0x10] sm:$0xff]
    %v147 = vld [vmem:[#allocation2 + $0x18] sm:$0xff]
    %v148 = vld [vmem:[#allocation5] sm:$0xff]
    %v149 = vld [vmem:[#allocation5 + $0x8] sm:$0xff]
    %v150 = vld [vmem:[#allocation5 + $0x10] sm:$0xff]
    %v151 = vld [vmem:[#allocation5 + $0x18] sm:$0xff]
    %vm152 = vcmask 261120
    %v153 = vsel %vm152, %v148, 0.0
    %154 = vadd.xlane.f32.xlu0 %v153
    %v155 = vpop.xlane.xlu0 %154
    %v156 = vsel %vm152, %v144, 0.0
    %157 = vadd.xlane.f32.xlu0 %v156
    %v158 = vpop.xlane.xlu0 %157
    %v159 = vsel %vm152, %v145, 0.0
    %160 = vadd.xlane.f32.xlu0 %v159
    %v161 = vpop.xlane.xlu0 %160
    %v162 = vsel %vm152, %v149, 0.0
    %163 = vadd.xlane.f32.xlu0 %v162
    %v164 = vpop.xlane.xlu0 %163
    %v165 = vsel %vm152, %v150, 0.0
    %166 = vadd.xlane.f32.xlu0 %v165
    %v167 = vpop.xlane.xlu0 %166
    %v168 = vsel %vm152, %v146, 0.0
    %169 = vadd.xlane.f32.xlu0 %v168
    %v170 = vpop.xlane.xlu0 %169
    %v171 = vsel %vm152, %v147, 0.0
    %172 = vadd.xlane.f32.xlu0 %v171
    %v173 = vpop.xlane.xlu0 %172
    %v174 = vsel %vm152, %v151, 0.0
    %175 = vadd.xlane.f32.xlu0 %v174
    %v176 = vpop.xlane.xlu0 %175
    %v177 = vrcp.pop 32.0
    %v178 = vmul.f32 %v155, %v177
    %v179 = vmul.f32 %v158, %v177
    %v180 = vmul.f32 %v161, %v177
    %v181 = vmul.f32 %v164, %v177
    %v182 = vmul.f32 %v167, %v177
    %v183 = vmul.f32 %v170, %v177
    %v184 = vmul.f32 %v173, %v177
    %v185 = vmul.f32 %v176, %v177
    %v186 = vmul.f32 %v148, %v148
    %v187 = vmul.f32 %v144, %v144
    %v188 = vmul.f32 %v145, %v145
    %v189 = vmul.f32 %v149, %v149
    %v190 = vmul.f32 %v150, %v150
    %v191 = vmul.f32 %v146, %v146
    %v192 = vmul.f32 %v147, %v147
    %v193 = vmul.f32 %v151, %v151
    %v194 = vsel %vm152, %v186, 0.0
    %195 = vadd.xlane.f32.xlu0 %v194
    %v196 = vpop.xlane.xlu0 %195
    %v197 = vsel %vm152, %v187, 0.0
    %198 = vadd.xlane.f32.xlu0 %v197
    %v199 = vpop.xlane.xlu0 %198
    %v200 = vsel %vm152, %v188, 0.0
    %201 = vadd.xlane.f32.xlu0 %v200
    %v202 = vpop.xlane.xlu0 %201
    %v203 = vsel %vm152, %v189, 0.0
    %204 = vadd.xlane.f32.xlu0 %v203
    %v205 = vpop.xlane.xlu0 %204
    %v206 = vsel %vm152, %v190, 0.0
    %207 = vadd.xlane.f32.xlu0 %v206
    %v208 = vpop.xlane.xlu0 %207
    %v209 = vsel %vm152, %v191, 0.0
    %210 = vadd.xlane.f32.xlu0 %v209
    %v211 = vpop.xlane.xlu0 %210
    %v212 = vsel %vm152, %v192, 0.0
    %213 = vadd.xlane.f32.xlu0 %v212
    %v214 = vpop.xlane.xlu0 %213
    %v215 = vsel %vm152, %v193, 0.0
    %216 = vadd.xlane.f32.xlu0 %v215
    %v217 = vpop.xlane.xlu0 %216
    %v218 = vmul.f32 %v196, %v177
    %v219 = vmul.f32 %v199, %v177
    %v220 = vmul.f32 %v202, %v177
    %v221 = vmul.f32 %v205, %v177
    %v222 = vmul.f32 %v208, %v177
    %v223 = vmul.f32 %v211, %v177
    %v224 = vmul.f32 %v214, %v177
    %v225 = vmul.f32 %v217, %v177
    %v226 = vmul.f32 %v178, %v178
    %v227 = vmul.f32 %v179, %v179
    %v228 = vmul.f32 %v180, %v180
    %v229 = vmul.f32 %v181, %v181
    %v230 = vmul.f32 %v182, %v182
    %v231 = vmul.f32 %v183, %v183
    %v232 = vmul.f32 %v184, %v184
    %v233 = vmul.f32 %v185, %v185
    %v234 = vsub.f32 %v218, %v226
    %v235 = vsub.f32 %v219, %v227
    %v236 = vsub.f32 %v220, %v228
    %v237 = vsub.f32 %v221, %v229
    %v238 = vsub.f32 %v222, %v230
    %v239 = vsub.f32 %v223, %v231
    %v240 = vsub.f32 %v224, %v232
    %v241 = vsub.f32 %v225, %v233
    %v242 = vmax.f32 %v234, 0.0
    %v243 = vmax.f32 %v235, 0.0
    %v244 = vmax.f32 %v236, 0.0
    %v245 = vmax.f32 %v237, 0.0
    %v246 = vmax.f32 %v238, 0.0
    %v247 = vmax.f32 %v239, 0.0
    %v248 = vmax.f32 %v240, 0.0
    %v249 = vmax.f32 %v241, 0.0
    %v250 = vsub.f32 %v148, %v178
    %v251 = vsub.f32 %v144, %v179
    %v252 = vsub.f32 %v145, %v180
    %v253 = vsub.f32 %v149, %v181
    %v254 = vsub.f32 %v150, %v182
    %v255 = vsub.f32 %v146, %v183
    %v256 = vsub.f32 %v147, %v184
    %v257 = vsub.f32 %v151, %v185
    %v258 = vadd.f32 %v242, 1e-05
    %v259 = vadd.f32 %v243, 1e-05
    %v260 = vadd.f32 %v244, 1e-05
    %v261 = vadd.f32 %v245, 1e-05
    %v262 = vadd.f32 %v246, 1e-05
    %v263 = vadd.f32 %v247, 1e-05
    %v264 = vadd.f32 %v248, 1e-05
    %v265 = vadd.f32 %v249, 1e-05
    %v266 = vrsqrt.pop %v258
    %v267 = vrsqrt.pop %v259
    %v268 = vrsqrt.pop %v260
    %v269 = vrsqrt.pop %v261
    %v270 = vrsqrt.pop %v262
    %v271 = vrsqrt.pop %v263
    %v272 = vrsqrt.pop %v264
    %v273 = vrsqrt.pop %v265
    %v274 = vmul.f32 %v250, %v266
    %v275 = vmul.f32 %v251, %v267
    %v276 = vmul.f32 %v252, %v268
    %v277 = vmul.f32 %v253, %v269
    %v278 = vmul.f32 %v254, %v270
    %v279 = vmul.f32 %v255, %v271
    %v280 = vmul.f32 %v256, %v272
    %v281 = vmul.f32 %v257, %v273
    %v282 = vld [vmem:[%s2] sm:$0x1]
    %v284 = vlaneseq
    %v285 = vshrl.u32 %v284, 7
    %v286 = vsub.s32 0, %v285
    %v287 = vrot.slane %v282, %v286
    %v289 = vmul.f32 %v274, %v287
    %v290 = vmul.f32 %v275, %v287
    %v291 = vmul.f32 %v276, %v287
    %v292 = vmul.f32 %v277, %v287
    %v293 = vmul.f32 %v278, %v287
    %v294 = vmul.f32 %v279, %v287
    %v295 = vmul.f32 %v280, %v287
    %v296 = vmul.f32 %v281, %v287
    %v297 = vld [vmem:[%s3] sm:$0x1]
    %v299 = vlaneseq
    %v300 = vshrl.u32 %v299, 7
    %v301 = vsub.s32 0, %v300
    %v302 = vrot.slane %v297, %v301
    %v304 = vadd.f32 %v289, %v302
    %v305 = vadd.f32 %v290, %v302
    %v306 = vadd.f32 %v291, %v302
    %v307 = vadd.f32 %v292, %v302
    %v308 = vadd.f32 %v293, %v302
    %v309 = vadd.f32 %v294, %v302
    %v310 = vadd.f32 %v295, %v302
    %v311 = vadd.f32 %v296, %v302
    %v312 = vpack.c.bf16 %v305, %v304
    %v313 = vpack.c.bf16 %v307, %v306
    %v314 = vpack.c.bf16 %v309, %v308
    %v315 = vpack.c.bf16 %v311, %v310
    %v316 = vld [vmem:[#allocation7] sm:$0xf]
    %v317 = vld [vmem:[#allocation7 + $0x4] sm:$0xf]
    %v318 = vld [vmem:[#allocation7 + $0x8] sm:$0xf]
    %v319 = vld [vmem:[#allocation7 + $0xc] sm:$0xf]
    %v320 = vld [vmem:[#allocation10] sm:$0x1]
    %v322 = vlaneseq
    %v323 = vshrl.u32 %v322, 7
    %v324 = vsub.s32 0, %v323
    %v325 = vrot.slane %v320, %v324
    %v331 = vunpack.c.l.b16 %v316
    %v332 = vunpack.c.l.b16 %v317
    %v333 = vunpack.c.l.b16 %v318
    %v334 = vunpack.c.l.b16 %v319
    %v335 = vpack.c.b16 %v332, %v331
    %v336 = vpack.c.b16 %v334, %v333
    %v340 = vsel %vm152, %v312, 0
    %v343 = vsel %vm152, %v313, 0
    %v346 = vsel %vm152, %v314, 0
    %v349 = vsel %vm152, %v315, 0
    %351 = vmatprep.subr.bf16.mxu0 0
    %352 = vmatpush1.bf16.msra.mxu0 0
    %353 = vmatprep.subr.bf16.mxu0 0
    %354 = vmatpush1.bf16.msra.mxu0 0
    %355 = vmatprep.subr.bf16.mxu0 0
    %356 = vmatpush1.bf16.msra.mxu0 0
    %357 = vmatprep.subr.bf16.mxu0 0
    %358 = vmatpush1.bf16.msra.mxu0 0
    %359 = vmatprep.subr.bf16.mxu0 0
    %360 = vmatpush1.bf16.msra.mxu0 0
    %361 = vmatprep.subr.bf16.mxu0 0
    %362 = vmatpush1.bf16.msra.mxu0 0
    %363 = vmatprep.subr.bf16.mxu0 0
    %364 = vmatpush1.bf16.msra.mxu0 %v336
    %365 = vmatprep.subr.bf16.mxu0 0
    %366 = vmatpush1.bf16.msra.mxu0 %v335
    %367 = vmatprep.subr.bf16.mxu0 0
    %368 = vmatpush2.bf16.msra.mxu0 0
    %369 = vmatprep.subr.bf16.mxu0 0
    %370 = vmatpush2.bf16.msra.mxu0 0
    %371 = vmatprep.subr.bf16.mxu0 0
    %372 = vmatpush2.bf16.msra.mxu0 0
    %373 = vmatprep.subr.bf16.mxu0 0
    %374 = vmatpush2.bf16.msra.mxu0 0
    %375 = vmatprep.subr.bf16.mxu0 0
    %376 = vmatpush2.bf16.msra.mxu0 0
    %377 = vmatprep.subr.bf16.mxu0 0
    %378 = vmatpush2.bf16.msra.mxu0 0
    %379 = vmatprep.subr.bf16.mxu0 0
    %380 = vmatpush2.bf16.msra.mxu0 0
    %381 = vmatprep.subr.bf16.mxu0 0
    %382 = vmatpush2.bf16.msra.mxu0 0
    %383 = vmatprep.mubr.bf16.mxu0 0
    %384 = vmatmul.mubr.bf16.gmra.mxu0 %v340
    %v385 = vpop.f32.mrf.mxu0
    %v386 = vadd.f32 %v325, %v385
    %v387 = vpop.f32.mrf.mxu0
    %v388 = vpop.f32.mrf.mxu0
    %v389 = vadd.f32 %v325, %v388
    %v390 = vpop.f32.mrf.mxu0
    %391 = vmatprep.mubr.bf16.mxu0 0
    %392 = vmatmul.mubr.bf16.gmra.mxu0 %v343
    %v393 = vpop.f32.mrf.mxu0
    %v394 = vadd.f32 %v325, %v393
    %v395 = vpop.f32.mrf.mxu0
    %v396 = vpop.f32.mrf.mxu0
    %v397 = vadd.f32 %v325, %v396
    %v398 = vpop.f32.mrf.mxu0
    %399 = vmatprep.mubr.bf16.mxu0 0
    %400 = vmatmul.mubr.bf16.gmra.mxu0 %v346
    %v401 = vpop.f32.mrf.mxu0
    %v402 = vadd.f32 %v325, %v401
    %v403 = vpop.f32.mrf.mxu0
    %v404 = vpop.f32.mrf.mxu0
    %v405 = vadd.f32 %v325, %v404
    %v406 = vpop.f32.mrf.mxu0
    %407 = vmatprep.mubr.bf16.mxu0 0
    %408 = vmatmul.mubr.bf16.gmra.mxu0 %v349
    %v409 = vpop.f32.mrf.mxu0
    %v410 = vadd.f32 %v325, %v409
    %v411 = vpop.f32.mrf.mxu0
    %v412 = vpop.f32.mrf.mxu0
    %v413 = vadd.f32 %v325, %v412
    %v414 = vpop.f32.mrf.mxu0
    %415 = vdwg.mxu0
    %v416 = vld [vmem:[#allocation8] sm:$0xf]
    %v417 = vld [vmem:[#allocation8 + $0x4] sm:$0xf]
    %v418 = vld [vmem:[#allocation8 + $0x8] sm:$0xf]
    %v419 = vld [vmem:[#allocation8 + $0xc] sm:$0xf]
    %v420 = vld [vmem:[#allocation11] sm:$0x1]
    %v422 = vlaneseq
    %v423 = vshrl.u32 %v422, 7
    %v424 = vsub.s32 0, %v423
    %v425 = vrot.slane %v420, %v424
    %v431 = vunpack.c.l.b16 %v416
    %v432 = vunpack.c.l.b16 %v417
    %v433 = vunpack.c.l.b16 %v418
    %v434 = vunpack.c.l.b16 %v419
    %v435 = vpack.c.b16 %v432, %v431
    %v436 = vpack.c.b16 %v434, %v433
    %439 = vmatprep.subr.bf16.mxu0 0
    %440 = vmatpush1.bf16.msra.mxu0 0
    %441 = vmatprep.subr.bf16.mxu0 0
    %442 = vmatpush1.bf16.msra.mxu0 0
    %443 = vmatprep.subr.bf16.mxu0 0
    %444 = vmatpush1.bf16.msra.mxu0 0
    %445 = vmatprep.subr.bf16.mxu0 0
    %446 = vmatpush1.bf16.msra.mxu0 0
    %447 = vmatprep.subr.bf16.mxu0 0
    %448 = vmatpush1.bf16.msra.mxu0 0
    %449 = vmatprep.subr.bf16.mxu0 0
    %450 = vmatpush1.bf16.msra.mxu0 0
    %451 = vmatprep.subr.bf16.mxu0 0
    %452 = vmatpush1.bf16.msra.mxu0 %v436
    %453 = vmatprep.subr.bf16.mxu0 0
    %454 = vmatpush1.bf16.msra.mxu0 %v435
    %455 = vmatprep.subr.bf16.mxu0 0
    %456 = vmatpush2.bf16.msra.mxu0 0
    %457 = vmatprep.subr.bf16.mxu0 0
    %458 = vmatpush2.bf16.msra.mxu0 0
    %459 = vmatprep.subr.bf16.mxu0 0
    %460 = vmatpush2.bf16.msra.mxu0 0
    %461 = vmatprep.subr.bf16.mxu0 0
    %462 = vmatpush2.bf16.msra.mxu0 0
    %463 = vmatprep.subr.bf16.mxu0 0
    %464 = vmatpush2.bf16.msra.mxu0 0
    %465 = vmatprep.subr.bf16.mxu0 0
    %466 = vmatpush2.bf16.msra.mxu0 0
    %467 = vmatprep.subr.bf16.mxu0 0
    %468 = vmatpush2.bf16.msra.mxu0 0
    %469 = vmatprep.subr.bf16.mxu0 0
    %470 = vmatpush2.bf16.msra.mxu0 0
    %471 = vmatprep.mubr.bf16.mxu0 0
    %472 = vmatmul.mubr.bf16.gmra.mxu0 %v340
    %v473 = vpop.f32.mrf.mxu0
    %v474 = vadd.f32 %v425, %v473
    %v475 = vpop.f32.mrf.mxu0
    %v476 = vpop.f32.mrf.mxu0
    %v477 = vadd.f32 %v425, %v476
    %v478 = vpop.f32.mrf.mxu0
    %479 = vmatprep.mubr.bf16.mxu0 0
    %480 = vmatmul.mubr.bf16.gmra.mxu0 %v343
    %v481 = vpop.f32.mrf.mxu0
    %v482 = vadd.f32 %v425, %v481
    %v483 = vpop.f32.mrf.mxu0
    %v484 = vpop.f32.mrf.mxu0
    %v485 = vadd.f32 %v425, %v484
    %v486 = vpop.f32.mrf.mxu0
    %487 = vmatprep.mubr.bf16.mxu0 0
    %488 = vmatmul.mubr.bf16.gmra.mxu0 %v346
    %v489 = vpop.f32.mrf.mxu0
    %v490 = vadd.f32 %v425, %v489
    %v491 = vpop.f32.mrf.mxu0
    %v492 = vpop.f32.mrf.mxu0
    %v493 = vadd.f32 %v425, %v492
    %v494 = vpop.f32.mrf.mxu0
    %495 = vmatprep.mubr.bf16.mxu0 0
    %496 = vmatmul.mubr.bf16.gmra.mxu0 %v349
    %v497 = vpop.f32.mrf.mxu0
    %v498 = vadd.f32 %v425, %v497
    %v499 = vpop.f32.mrf.mxu0
    %v500 = vpop.f32.mrf.mxu0
    %v501 = vadd.f32 %v425, %v500
    %v502 = vpop.f32.mrf.mxu0
    %503 = vdwg.mxu0
    %v504 = vxor.u32 %v474, 2147483648
    %v505 = vxor.u32 %v477, 2147483648
    %v506 = vxor.u32 %v482, 2147483648
    %v507 = vxor.u32 %v485, 2147483648
    %v508 = vxor.u32 %v490, 2147483648
    %v509 = vxor.u32 %v493, 2147483648
    %v510 = vxor.u32 %v498, 2147483648
    %v511 = vxor.u32 %v501, 2147483648
    %v512 = vmul.f32 %v504, 1.442695
    %v513 = vpow.pop %v512
    %v514 = vmul.f32 %v505, 1.442695
    %v515 = vpow.pop %v514
    %v516 = vmul.f32 %v506, 1.442695
    %v517 = vpow.pop %v516
    %v518 = vmul.f32 %v507, 1.442695
    %v519 = vpow.pop %v518
    %v520 = vmul.f32 %v508, 1.442695
    %v521 = vpow.pop %v520
    %v522 = vmul.f32 %v509, 1.442695
    %v523 = vpow.pop %v522
    %v524 = vmul.f32 %v510, 1.442695
    %v525 = vpow.pop %v524
    %v526 = vmul.f32 %v511, 1.442695
    %v527 = vpow.pop %v526
    %v528 = vadd.f32 %v513, 1.0
    %v529 = vadd.f32 %v515, 1.0
    %v530 = vadd.f32 %v517, 1.0
    %v531 = vadd.f32 %v519, 1.0
    %v532 = vadd.f32 %v521, 1.0
    %v533 = vadd.f32 %v523, 1.0
    %v534 = vadd.f32 %v525, 1.0
    %v535 = vadd.f32 %v527, 1.0
    %v536 = vrcp.pop %v528
    %v537 = vmul.f32 1.0, %v536
    %v538 = vrcp.pop %v529
    %v539 = vmul.f32 1.0, %v538
    %v540 = vrcp.pop %v530
    %v541 = vmul.f32 1.0, %v540
    %v542 = vrcp.pop %v531
    %v543 = vmul.f32 1.0, %v542
    %v544 = vrcp.pop %v532
    %v545 = vmul.f32 1.0, %v544
    %v546 = vrcp.pop %v533
    %v547 = vmul.f32 1.0, %v546
    %v548 = vrcp.pop %v534
    %v549 = vmul.f32 1.0, %v548
    %v550 = vrcp.pop %v535
    %v551 = vmul.f32 1.0, %v550
    %v552 = vmul.f32 %v386, %v537
    %v553 = vmul.f32 %v389, %v539
    %v554 = vmul.f32 %v394, %v541
    %v555 = vmul.f32 %v397, %v543
    %v556 = vmul.f32 %v402, %v545
    %v557 = vmul.f32 %v405, %v547
    %v558 = vmul.f32 %v410, %v549
    %v559 = vmul.f32 %v413, %v551
    %p560 = scmp.eq.s32.totalorder 0, 0
    %s561 = scalar_select %p560, 8, 0
    %s562 = scalar_select %p560, 24, 32
    %v563 = vlaneseq
    %v564 = vshrl.u32 %v563, 7
    %v565 = vadd.s32 %v564, 8
    %v566 = vadd.s32 %v564, 16
    %v567 = vadd.s32 %v564, 24
    %v568 = vstv %s561
    %vm569 = vcmp.ge.s32.totalorder %v564, %v568
    %vm570 = vcmp.ge.s32.totalorder %v565, %v568
    %vm571 = vcmp.ge.s32.totalorder %v566, %v568
    %vm572 = vcmp.ge.s32.totalorder %v567, %v568
    %v573 = vstv %s562
    %vm574 = vcmp.lt.s32.totalorder %v564, %v573
    %vm575 = vcmp.lt.s32.totalorder %v565, %v573
    %vm576 = vcmp.lt.s32.totalorder %v566, %v573
    %vm577 = vcmp.lt.s32.totalorder %v567, %v573
    %vm578 = vmand %vm569, %vm574
    %vm579 = vmand %vm570, %vm575
    %vm580 = vmand %vm571, %vm576
    %vm581 = vmand %vm572, %vm577
    %v582 = vsel %vm578, 1, 0
    %v583 = vsel %vm579, 1, 0
    %v584 = vsel %vm580, 1, 0
    %v585 = vsel %vm581, 1, 0
    %v586 = vcvt.s32.f32 %v582
    %v587 = vcvt.s32.f32 %v583
    %v588 = vcvt.s32.f32 %v584
    %v589 = vcvt.s32.f32 %v585
    %v590 = vmul.f32 %v552, %v586
    %v591 = vmul.f32 %v553, %v587
    %v592 = vmul.f32 %v554, %v588
    %v593 = vmul.f32 %v555, %v589
    %v594 = vmul.f32 %v556, %v586
    %v595 = vmul.f32 %v557, %v587
    %v596 = vmul.f32 %v558, %v588
    %v597 = vmul.f32 %v559, %v589
    %v598 = vld [vmem:[#allocation13] sm:$0x7f]
    %v599 = vlaneseq
    %v600 = vshrl.u32 %v599, 7
    %v601 = vsub.s32 0, %v600
    %v602 = vrot.slane %v598, %v601
    %v603 = vmul.f32 %v590, %v602
    %v604 = vmul.f32 %v591, %v602
    %v605 = vmul.f32 %v592, %v602
    %v606 = vmul.f32 %v594, %v602
    %v607 = vmul.f32 %v595, %v602
    %v608 = vmul.f32 %v596, %v602
    %v609 = vadd.f32 %v603, 0.0
    %v610 = vadd.f32 %v604, 0.0
    %v611 = vadd.f32 %v605, 0.0
    %v612 = vadd.f32 %v606, 0.0
    %v613 = vadd.f32 %v607, 0.0
    %v614 = vadd.f32 %v608, 0.0
    %v615 = vlaneseq
    %v616 = vshrl.u32 %v615, 7
    %v617 = vsub.s32 1, %v616
    %v618 = vrot.slane %v598, %v617
    %v619 = vmul.f32 %v590, %v618
    %v620 = vmul.f32 %v591, %v618
    %v621 = vmul.f32 %v592, %v618
    %v622 = vmul.f32 %v594, %v618
    %v623 = vmul.f32 %v595, %v618
    %v624 = vmul.f32 %v596, %v618
    %vm631 = vcmask 1046528
    %v632 = vrot.slane %v619, 1
    %v633 = vrot.slane %v620, 1
    %v634 = vsel %vm631, %v632, %v633
    %v635 = vrot.slane %v621, 1
    %v636 = vsel %vm631, %v633, %v635
    %v637 = vrot.slane %v622, 1
    %v638 = vrot.slane %v623, 1
    %v639 = vsel %vm631, %v637, %v638
    %v640 = vrot.slane %v624, 1
    %v641 = vsel %vm631, %v638, %v640
    %v648 = vadd.f32 %v609, %v634
    %v649 = vadd.f32 %v610, %v636
    %v650 = vadd.f32 %v611, %v635
    %v651 = vadd.f32 %v612, %v639
    %v652 = vadd.f32 %v613, %v641
    %v653 = vadd.f32 %v614, %v640
    %v654 = vlaneseq
    %v655 = vshrl.u32 %v654, 7
    %v656 = vsub.s32 2, %v655
    %v657 = vrot.slane %v598, %v656
    %v658 = vmul.f32 %v590, %v657
    %v659 = vmul.f32 %v591, %v657
    %v660 = vmul.f32 %v592, %v657
    %v661 = vmul.f32 %v594, %v657
    %v662 = vmul.f32 %v595, %v657
    %v663 = vmul.f32 %v596, %v657
    %vm670 = vcmask 1045504
    %v671 = vrot.slane %v658, 2
    %v672 = vrot.slane %v659, 2
    %v673 = vsel %vm670, %v671, %v672
    %v674 = vrot.slane %v660, 2
    %v675 = vsel %vm670, %v672, %v674
    %v676 = vrot.slane %v661, 2
    %v677 = vrot.slane %v662, 2
    %v678 = vsel %vm670, %v676, %v677
    %v679 = vrot.slane %v663, 2
    %v680 = vsel %vm670, %v677, %v679
    %v687 = vadd.f32 %v648, %v673
    %v688 = vadd.f32 %v649, %v675
    %v689 = vadd.f32 %v650, %v674
    %v690 = vadd.f32 %v651, %v678
    %v691 = vadd.f32 %v652, %v680
    %v692 = vadd.f32 %v653, %v679
    %v693 = vlaneseq
    %v694 = vshrl.u32 %v693, 7
    %v695 = vsub.s32 3, %v694
    %v696 = vrot.slane %v598, %v695
    %v697 = vmul.f32 %v591, %v696
    %v698 = vmul.f32 %v592, %v696
    %v699 = vmul.f32 %v595, %v696
    %v700 = vmul.f32 %v596, %v696
    %vm705 = vcmask 1044480
    %v706 = vrot.slane %v697, 3
    %v707 = vrot.slane %v698, 3
    %v708 = vsel %vm705, %v706, %v707
    %v709 = vrot.slane %v699, 3
    %v710 = vrot.slane %v700, 3
    %v711 = vsel %vm705, %v709, %v710
    %v718 = vadd.f32 %v687, %v706
    %v719 = vadd.f32 %v688, %v708
    %v720 = vadd.f32 %v689, %v707
    %v721 = vadd.f32 %v690, %v709
    %v722 = vadd.f32 %v691, %v711
    %v723 = vadd.f32 %v692, %v710
    %v724 = vlaneseq
    %v725 = vshrl.u32 %v724, 7
    %v726 = vsub.s32 4, %v725
    %v727 = vrot.slane %v598, %v726
    %v728 = vmul.f32 %v591, %v727
    %v729 = vmul.f32 %v592, %v727
    %v730 = vmul.f32 %v593, %v727
    %v731 = vmul.f32 %v595, %v727
    %v732 = vmul.f32 %v596, %v727
    %v733 = vmul.f32 %v597, %v727
    %vm740 = vcmask 1043456
    %v741 = vrot.slane %v728, 4
    %v742 = vrot.slane %v729, 4
    %v743 = vsel %vm740, %v741, %v742
    %v744 = vrot.slane %v730, 4
    %v745 = vsel %vm740, %v742, %v744
    %v746 = vrot.slane %v731, 4
    %v747 = vrot.slane %v732, 4
    %v748 = vsel %vm740, %v746, %v747
    %v749 = vrot.slane %v733, 4
    %v750 = vsel %vm740, %v747, %v749
    %v757 = vadd.f32 %v718, %v741
    %v758 = vadd.f32 %v719, %v743
    %v759 = vadd.f32 %v720, %v745
    %v760 = vadd.f32 %v721, %v746
    %v761 = vadd.f32 %v722, %v748
    %v762 = vadd.f32 %v723, %v750
    %v763 = vlaneseq
    %v764 = vshrl.u32 %v763, 7
    %v765 = vsub.s32 5, %v764
    %v766 = vrot.slane %v598, %v765
    %v767 = vmul.f32 %v591, %v766
    %v768 = vmul.f32 %v592, %v766
    %v769 = vmul.f32 %v593, %v766
    %v770 = vmul.f32 %v595, %v766
    %v771 = vmul.f32 %v596, %v766
    %v772 = vmul.f32 %v597, %v766
    %vm779 = vcmask 1042432
    %v780 = vrot.slane %v767, 5
    %v781 = vrot.slane %v768, 5
    %v782 = vsel %vm779, %v780, %v781
    %v783 = vrot.slane %v769, 5
    %v784 = vsel %vm779, %v781, %v783
    %v785 = vrot.slane %v770, 5
    %v786 = vrot.slane %v771, 5
    %v787 = vsel %vm779, %v785, %v786
    %v788 = vrot.slane %v772, 5
    %v789 = vsel %vm779, %v786, %v788
    %v796 = vadd.f32 %v757, %v780
    %v797 = vadd.f32 %v758, %v782
    %v798 = vadd.f32 %v759, %v784
    %v799 = vadd.f32 %v760, %v785
    %v800 = vadd.f32 %v761, %v787
    %v801 = vadd.f32 %v762, %v789
    %v802 = vlaneseq
    %v803 = vshrl.u32 %v802, 7
    %v804 = vsub.s32 6, %v803
    %v805 = vrot.slane %v598, %v804
    %v806 = vmul.f32 %v591, %v805
    %v807 = vmul.f32 %v592, %v805
    %v808 = vmul.f32 %v593, %v805
    %v809 = vmul.f32 %v595, %v805
    %v810 = vmul.f32 %v596, %v805
    %v811 = vmul.f32 %v597, %v805
    %vm818 = vcmask 1041408
    %v819 = vrot.slane %v806, 6
    %v820 = vrot.slane %v807, 6
    %v821 = vsel %vm818, %v819, %v820
    %v822 = vrot.slane %v808, 6
    %v823 = vsel %vm818, %v820, %v822
    %v824 = vrot.slane %v809, 6
    %v825 = vrot.slane %v810, 6
    %v826 = vsel %vm818, %v824, %v825
    %v827 = vrot.slane %v811, 6
    %v828 = vsel %vm818, %v825, %v827
    %v835 = vadd.f32 %v796, %v819
    %v836 = vadd.f32 %v797, %v821
    %v837 = vadd.f32 %v798, %v823
    %v838 = vadd.f32 %v799, %v824
    %v839 = vadd.f32 %v800, %v826
    %v840 = vadd.f32 %v801, %v828
    %v841 = vld [vmem:[#allocation14] sm:$0x1]
    %v843 = vlaneseq
    %v844 = vshrl.u32 %v843, 7
    %v845 = vsub.s32 0, %v844
    %v846 = vrot.slane %v841, %v845
    %v848 = vadd.f32 %v835, %v846
    %v849 = vadd.f32 %v836, %v846
    %v850 = vadd.f32 %v837, %v846
    %v851 = vadd.f32 %v838, %v846
    %v852 = vadd.f32 %v839, %v846
    %v853 = vadd.f32 %v840, %v846
    %v854 = vxor.u32 %v848, 2147483648
    %v855 = vxor.u32 %v849, 2147483648
    %v856 = vxor.u32 %v850, 2147483648
    %v857 = vxor.u32 %v851, 2147483648
    %v858 = vxor.u32 %v852, 2147483648
    %v859 = vxor.u32 %v853, 2147483648
    %v860 = vmul.f32 %v854, 1.442695
    %v861 = vpow.pop %v860
    %v862 = vmul.f32 %v855, 1.442695
    %v863 = vpow.pop %v862
    %v864 = vmul.f32 %v856, 1.442695
    %v865 = vpow.pop %v864
    %v866 = vmul.f32 %v857, 1.442695
    %v867 = vpow.pop %v866
    %v868 = vmul.f32 %v858, 1.442695
    %v869 = vpow.pop %v868
    %v870 = vmul.f32 %v859, 1.442695
    %v871 = vpow.pop %v870
    %v872 = vadd.f32 %v861, 1.0
    %v873 = vadd.f32 %v863, 1.0
    %v874 = vadd.f32 %v865, 1.0
    %v875 = vadd.f32 %v867, 1.0
    %v876 = vadd.f32 %v869, 1.0
    %v877 = vadd.f32 %v871, 1.0
    %v878 = vrcp.pop %v872
    %v879 = vmul.f32 1.0, %v878
    %v880 = vrcp.pop %v873
    %v881 = vmul.f32 1.0, %v880
    %v882 = vrcp.pop %v874
    %v883 = vmul.f32 1.0, %v882
    %v884 = vrcp.pop %v875
    %v885 = vmul.f32 1.0, %v884
    %v886 = vrcp.pop %v876
    %v887 = vmul.f32 1.0, %v886
    %v888 = vrcp.pop %v877
    %v889 = vmul.f32 1.0, %v888
    %v890 = vmul.f32 %v848, %v879
    %v891 = vmul.f32 %v849, %v881
    %v892 = vmul.f32 %v850, %v883
    %v893 = vmul.f32 %v851, %v885
    %v894 = vmul.f32 %v852, %v887
    %v895 = vmul.f32 %v853, %v889
    %v902 = vrot.slane %v890, 5
    %v903 = vrot.slane %v891, 5
    %v904 = vsel %vm779, %v902, %v903
    %v905 = vrot.slane %v892, 5
    %v906 = vsel %vm779, %v903, %v905
    %v907 = vrot.slane %v893, 5
    %v908 = vrot.slane %v894, 5
    %v909 = vsel %vm779, %v907, %v908
    %v910 = vrot.slane %v895, 5
    %v911 = vsel %vm779, %v908, %v910
    %v916 = vpack.c.bf16 %v906, %v904
    %v917 = vpack.c.bf16 %v911, %v909
    %v918 = vld [vmem:[%s10] sm:$0xf]
    %v919 = vld [vmem:[%s10 + $0x4] sm:$0xf]
    %v920 = vld [vmem:[%s10 + $0x8] sm:$0xf]
    %v921 = vld [vmem:[%s10 + $0xc] sm:$0xf]
    %v922 = vld [vmem:[%s11] sm:$0x1]
    %v924 = vlaneseq
    %v925 = vshrl.u32 %v924, 7
    %v926 = vsub.s32 0, %v925
    %v927 = vrot.slane %v922, %v926
    %v933 = vunpack.c.l.b16 %v918
    %v934 = vunpack.c.l.b16 %v919
    %v935 = vunpack.c.l.b16 %v920
    %v936 = vunpack.c.l.b16 %v921
    %v937 = vpack.c.b16 %v934, %v933
    %v938 = vpack.c.b16 %v936, %v935
    %v942 = vsel %vm152, %v916, 0
    %v945 = vsel %vm152, %v917, 0
    %947 = vmatprep.subr.bf16.mxu0 0
    %948 = vmatpush1.bf16.msra.mxu0 0
    %949 = vmatprep.subr.bf16.mxu0 0
    %950 = vmatpush1.bf16.msra.mxu0 0
    %951 = vmatprep.subr.bf16.mxu0 0
    %952 = vmatpush1.bf16.msra.mxu0 0
    %953 = vmatprep.subr.bf16.mxu0 0
    %954 = vmatpush1.bf16.msra.mxu0 0
    %955 = vmatprep.subr.bf16.mxu0 0
    %956 = vmatpush1.bf16.msra.mxu0 0
    %957 = vmatprep.subr.bf16.mxu0 0
    %958 = vmatpush1.bf16.msra.mxu0 0
    %959 = vmatprep.subr.bf16.mxu0 0
    %960 = vmatpush1.bf16.msra.mxu0 %v938
    %961 = vmatprep.subr.bf16.mxu0 0
    %962 = vmatpush1.bf16.msra.mxu0 %v937
    %963 = vmatprep.subr.bf16.mxu0 0
    %964 = vmatpush2.bf16.msra.mxu0 0
    %965 = vmatprep.subr.bf16.mxu0 0
    %966 = vmatpush2.bf16.msra.mxu0 0
    %967 = vmatprep.subr.bf16.mxu0 0
    %968 = vmatpush2.bf16.msra.mxu0 0
    %969 = vmatprep.subr.bf16.mxu0 0
    %970 = vmatpush2.bf16.msra.mxu0 0
    %971 = vmatprep.subr.bf16.mxu0 0
    %972 = vmatpush2.bf16.msra.mxu0 0
    %973 = vmatprep.subr.bf16.mxu0 0
    %974 = vmatpush2.bf16.msra.mxu0 0
    %975 = vmatprep.subr.bf16.mxu0 0
    %976 = vmatpush2.bf16.msra.mxu0 0
    %977 = vmatprep.subr.bf16.mxu0 0
    %978 = vmatpush2.bf16.msra.mxu0 0
    %979 = vmatprep.mubr.bf16.mxu0 0
    %980 = vmatmul.mubr.bf16.gmra.mxu0 %v942
    %v981 = vpop.f32.mrf.mxu0
    %v982 = vadd.f32 %v927, %v981
    %v983 = vpop.f32.mrf.mxu0
    %v984 = vpop.f32.mrf.mxu0
    %v985 = vadd.f32 %v927, %v984
    %v986 = vpop.f32.mrf.mxu0
    %987 = vmatprep.mubr.bf16.mxu0 0
    %988 = vmatmul.mubr.bf16.gmra.mxu0 %v945
    %v989 = vpop.f32.mrf.mxu0
    %v990 = vadd.f32 %v927, %v989
    %v991 = vpop.f32.mrf.mxu0
    %v992 = vpop.f32.mrf.mxu0
    %v993 = vadd.f32 %v927, %v992
    %v994 = vpop.f32.mrf.mxu0
    %995 = vdwg.mxu0
    %v996 = vadd.f32 %v982, %v144
    %v997 = vadd.f32 %v985, %v145
    %v998 = vadd.f32 %v990, %v146
    %v999 = vadd.f32 %v993, %v147
    %1000 = vst.msk [vmem:[#allocation16] sm:$0xff] %vm152, %v996
    %1001 = vst.msk [vmem:[#allocation16 + $0x8] sm:$0xff] %vm152, %v997
    %1002 = vst.msk [vmem:[#allocation16 + $0x10] sm:$0xff] %vm152, %v998
    %1003 = vst.msk [vmem:[#allocation16 + $0x18] sm:$0xff] %vm152, %v999
    // Predicated region
    $region82: #{tpu_custom_call.1} parent=1 // pred_check
      _
    $region83: #{tpu_custom_call.1} parent=1 // pred_check_branch
      %1005 = sbr.rel (0) target = $region85
    $region84: #{tpu_custom_call.1} parent=1 // pred_region
      %s1007 = ssub.s32 512, 512
      %1008 = vsyncadd [#allocation4], %s1007
      %s1009 = sshll.u32 [#allocation16], 4
      %s1010 = int_to_ptr.vmem [resolvable:$true] %s1009
      %1015 = dma.vmem_to_hbm [thread:$0]  %s1010, 512, %s12, [#allocation4], 128, 128, 8
    $region85: #{tpu_custom_call.1} parent=1 // pred_fallthru
      _
    // Predicated region
    $region86: #{tpu_custom_call.1} parent=1 // pred_check
      _
    $region87: #{tpu_custom_call.1} parent=1 // pred_check_branch
      %1017 = sbr.rel (0) target = $region89
    $region88: #{tpu_custom_call.1} parent=1 // pred_region
      %1018 = dma.done [#allocation4], 512
    $region89: #{tpu_custom_call.1} parent=1 // pred_fallthru
      _
    %1019 = vsyncpa [#allocation3], 1
    %1020 = vsyncpa [#allocation6], 1
    %1021 = vsyncpa [#allocation9], 1
    %1022 = vsyncpa [#allocation12], 1
    %1023 = vsyncpa [#allocation15], 1
    %1024 = vsyncpa [#allocation4], 1

</llo_original>
